<compile_context>
chip_gen: v6e
topology: v6e:2x2x1
jax: 0.10.0
libtpu: 0.0.40
codegen_flags: <defaults>
</compile_context>

<pallas_src>
import math

import jax
import jax.numpy as jnp
from jax.experimental import pallas as pl
from jax.experimental.pallas import tpu as pltpu

LOG_STD_MAX = 2.0
LOG_STD_MIN = -20.0
# Python float (NOT a jnp scalar) so it is inlined as a literal instead of
# being captured as an f32[] constant by the kernel trace.
_HALF_LOG_2PI = 0.5 * math.log(2.0 * math.pi)

_OUT_PAD = 128  # lane-dense output slab width


def _round_up(x, m):
    return ((x + m - 1) // m) * m


def actor_kernel(state_ref, w1_ref, b1_ref, w2_ref, b2_ref,
                 wh_ref, bh_ref, eps_ref, out_ref):
    x = state_ref[...]                                             # (Bt, S)

    # hidden MLP: Linear -> ReLU -> Linear -> ReLU
    h1 = jnp.dot(x, w1_ref[...], preferred_element_type=jnp.float32) + b1_ref[...]
    h1 = jnp.maximum(h1, 0.0)
    h2 = jnp.dot(h1, w2_ref[...], preferred_element_type=jnp.float32) + b2_ref[...]
    h2 = jnp.maximum(h2, 0.0)

    # fused heads: one matmul producing [mean | log_std]
    head = jnp.dot(h2, wh_ref[...], preferred_element_type=jnp.float32) + bh_ref[...]
    act_dim = eps_ref.shape[1]
    mean = head[:, :act_dim]
    log_std = jnp.clip(head[:, act_dim:], LOG_STD_MIN, LOG_STD_MAX)
    std = jnp.exp(log_std)

    # reparameterized sample + tanh squash
    eps = eps_ref[...]
    z = mean + std * eps
    action = jnp.tanh(z)

    # Normal(mean, std).log_prob(z) - log(1 - tanh(z)^2 + 1e-6)
    # Note (z - mean) / std == eps exactly, so use eps (no divide).
    log_prob = -0.5 * eps * eps - log_std - _HALF_LOG_2PI
    log_prob = log_prob - jnp.log(1.0 - action * action + 1e-6)
    logp = jnp.sum(log_prob, axis=-1, keepdims=True)               # (Bt, 1)

    # Lane-dense output slab: action in lanes [0, A), logp in lane A, zero pad.
    bt = action.shape[0]
    pad = jnp.zeros((bt, out_ref.shape[1] - act_dim - 1), jnp.float32)
    out_ref[...] = jnp.concatenate([action, logp, pad],
                                   axis=-1).astype(out_ref.dtype)


def actor_forward(state, params, eps, *, b_tile=None):
    """state: (B, state_dim) f32; eps: (B, action_dim) f32 standard normal.

    Returns (action (B, action_dim), log_prob (B, 1)).
    """
    B, _ = state.shape
    action_dim = eps.shape[1]

    # Batch tile: multiple of 8 (f32 sublanes). Big enough to amortize the
    # ~0.35 us per-step overhead at large B; tiny batches use one tile.
    # TODO(synk): halve the default tile (and/or raise vmem_limit_bytes) when
    # targeting v7x's 64 MiB VMEM with very large hidden sizes.
    if b_tile is None:
        b_tile = 256 if B >= 256 else _round_up(B, 8)
    b_tile = min(b_tile, _round_up(B, 8))

    # Pad batch to a multiple of the tile (padded rows compute harmless junk
    # that the wrapper slices off).
    Bp = _round_up(B, b_tile)
    if Bp != B:
        state = jnp.pad(state, ((0, Bp - B), (0, 0)))
        eps = jnp.pad(eps, ((0, Bp - B), (0, 0)))

    # Fuse the two heads into a single weight / bias (one matmul, fewer DMAs).
    w_head = jnp.concatenate([params["wm"], params["ws"]], axis=1)   # (H, 2A)
    b_head = jnp.concatenate([params["bm"], params["bs"]], axis=1)   # (1, 2A)

    row_spec = lambda a: pl.BlockSpec((b_tile, a.shape[1]), lambda i: (i, 0))
    res_spec = lambda a: pl.BlockSpec(a.shape, lambda i: (0, 0))  # VMEM-resident

    args = (state, params["w1"], params["b1"], params["w2"], params["b2"],
            w_head, b_head, eps)
    in_specs = [row_spec(state),
                res_spec(params["w1"]), res_spec(params["b1"]),
                res_spec(params["w2"]), res_spec(params["b2"]),
                res_spec(w_head), res_spec(b_head),
                row_spec(eps)]

    out = pl.pallas_call(
        actor_kernel,
        out_shape=jax.ShapeDtypeStruct((Bp, _OUT_PAD), jnp.float32),
        grid=(Bp // b_tile,),
        in_specs=in_specs,
        out_specs=pl.BlockSpec((b_tile, _OUT_PAD), lambda i: (i, 0)),
        compiler_params=pltpu.CompilerParams(
            dimension_semantics=("parallel",)),
    )(*args)

    action = out[:B, :action_dim]
    log_prob = out[:B, action_dim:action_dim + 1]
    return action, log_prob


def init_params(key, state_dim, action_dim, hidden_dim):
    """Deterministic init, mimicking torch.nn.Linear's uniform(-1/sqrt(fan_in), +)."""
    def linear(k, fan_in, fan_out):
        kw, kb = jax.random.split(k)
        bound = 1.0 / math.sqrt(fan_in)
        w = jax.random.uniform(kw, (fan_in, fan_out), jnp.float32, -bound, bound)
        b = jax.random.uniform(kb, (1, fan_out), jnp.float32, -bound, bound)
        return w, b

    k1, k2, k3, k4 = jax.random.split(key, 4)
    w1, b1 = linear(k1, state_dim, hidden_dim)
    w2, b2 = linear(k2, hidden_dim, hidden_dim)
    wm, bm = linear(k3, hidden_dim, action_dim)
    ws, bs = linear(k4, hidden_dim, action_dim)
    return dict(w1=w1, b1=b1, w2=w2, b2=b2, wm=wm, bm=bm, ws=ws, bs=bs)


if __name__ == "__main__":
    batch, state_dim, action_dim, hidden_dim = 8, 16, 4, 32

    key = jax.random.PRNGKey(0)
    kp, ks, ke = jax.random.split(key, 3)

    params = init_params(kp, state_dim, action_dim, hidden_dim)
    state = jax.random.normal(ks, (batch, state_dim), jnp.float32)
    eps = jax.random.normal(ke, (batch, action_dim), jnp.float32)

    action, log_prob = actor_forward(state, params, eps)
    jax.block_until_ready((action, log_prob))

    assert action.shape == (batch, action_dim)
    assert log_prob.shape == (batch, 1)
    assert bool(jnp.all(jnp.abs(action) <= 1.0))
    assert bool(jnp.all(jnp.isfinite(action))) and bool(jnp.all(jnp.isfinite(log_prob)))
    print("KERNEL_OK")
</pallas_src>

<mosaic_0001>
module attributes {stable_mosaic.version = 11 : i64} {
  func.func @actor_kernel(%arg0: i32, %arg1: memref<8x16xf32, #tpu.memory_space<vmem>>, %arg2: memref<16x32xf32, #tpu.memory_space<vmem>>, %arg3: memref<1x32xf32, #tpu.memory_space<vmem>>, %arg4: memref<32x32xf32, #tpu.memory_space<vmem>>, %arg5: memref<1x32xf32, #tpu.memory_space<vmem>>, %arg6: memref<32x8xf32, #tpu.memory_space<vmem>>, %arg7: memref<1x8xf32, #tpu.memory_space<vmem>>, %arg8: memref<8x4xf32, #tpu.memory_space<vmem>>, %arg9: memref<8x128xf32, #tpu.memory_space<vmem>>) attributes {dimension_semantics = [#tpu.dimension_semantics<parallel>], iteration_bounds = array<i64: 1>, scalar_prefetch = 0 : i64, scratch_operands = 0 : i64, tpu.core_type = #tpu.core_type<tc>, window_params = [{transform_indices = @transform_0, window_bounds = array<i64: 8, 16>}, {pipeline_mode = #tpu.pipeline_mode<synchronous>, transform_indices = @transform_1, window_bounds = array<i64: 16, 32>}, {pipeline_mode = #tpu.pipeline_mode<synchronous>, transform_indices = @transform_2, window_bounds = array<i64: 1, 32>}, {pipeline_mode = #tpu.pipeline_mode<synchronous>, transform_indices = @transform_3, window_bounds = array<i64: 32, 32>}, {pipeline_mode = #tpu.pipeline_mode<synchronous>, transform_indices = @transform_4, window_bounds = array<i64: 1, 32>}, {pipeline_mode = #tpu.pipeline_mode<synchronous>, transform_indices = @transform_5, window_bounds = array<i64: 32, 8>}, {pipeline_mode = #tpu.pipeline_mode<synchronous>, transform_indices = @transform_6, window_bounds = array<i64: 1, 8>}, {transform_indices = @transform_7, window_bounds = array<i64: 8, 4>}, {transform_indices = @transform_8, window_bounds = array<i64: 8, 128>}]} {
    %c0 = arith.constant 0 : index
    %c0_0 = arith.constant 0 : index
    %0 = vector.load %arg1[%c0, %c0_0] : memref<8x16xf32, #tpu.memory_space<vmem>>, vector<8x16xf32>
    %c0_1 = arith.constant 0 : index
    %c0_2 = arith.constant 0 : index
    %1 = vector.load %arg2[%c0_1, %c0_2] : memref<16x32xf32, #tpu.memory_space<vmem>>, vector<16x32xf32>
    %cst = arith.constant dense<0.000000e+00> : vector<8x32xf32>
    %2 = tpu.matmul %0, %1, %cst {dimension_numbers = #tpu.dot_dimension_numbers<[1], [0], [0], [1], [0, 0, 1, 1], [], []>} : vector<8x16xf32>, vector<16x32xf32>, vector<8x32xf32> -> vector<8x32xf32>
    %c0_3 = arith.constant 0 : index
    %c0_4 = arith.constant 0 : index
    %3 = vector.load %arg3[%c0_3, %c0_4] : memref<1x32xf32, #tpu.memory_space<vmem>>, vector<1x32xf32>
    %4 = vector.broadcast %3 : vector<1x32xf32> to vector<8x32xf32>
    %5 = arith.addf %2, %4 : vector<8x32xf32>
    %cst_5 = arith.constant 0.000000e+00 : f32
    %6 = vector.broadcast %cst_5 : f32 to vector<8x32xf32>
    %7 = arith.maximumf %5, %6 : vector<8x32xf32>
    %c0_6 = arith.constant 0 : index
    %c0_7 = arith.constant 0 : index
    %8 = vector.load %arg4[%c0_6, %c0_7] : memref<32x32xf32, #tpu.memory_space<vmem>>, vector<32x32xf32>
    %cst_8 = arith.constant dense<0.000000e+00> : vector<8x32xf32>
    %9 = tpu.matmul %7, %8, %cst_8 {dimension_numbers = #tpu.dot_dimension_numbers<[1], [0], [0], [1], [0, 0, 1, 1], [], []>} : vector<8x32xf32>, vector<32x32xf32>, vector<8x32xf32> -> vector<8x32xf32>
    %c0_9 = arith.constant 0 : index
    %c0_10 = arith.constant 0 : index
    %10 = vector.load %arg5[%c0_9, %c0_10] : memref<1x32xf32, #tpu.memory_space<vmem>>, vector<1x32xf32>
    %11 = vector.broadcast %10 : vector<1x32xf32> to vector<8x32xf32>
    %12 = arith.addf %9, %11 : vector<8x32xf32>
    %cst_11 = arith.constant 0.000000e+00 : f32
    %13 = vector.broadcast %cst_11 : f32 to vector<8x32xf32>
    %14 = arith.maximumf %12, %13 : vector<8x32xf32>
    %c0_12 = arith.constant 0 : index
    %c0_13 = arith.constant 0 : index
    %15 = vector.load %arg6[%c0_12, %c0_13] : memref<32x8xf32, #tpu.memory_space<vmem>>, vector<32x8xf32>
    %cst_14 = arith.constant dense<0.000000e+00> : vector<8x8xf32>
    %16 = tpu.matmul %14, %15, %cst_14 {dimension_numbers = #tpu.dot_dimension_numbers<[1], [0], [0], [1], [0, 0, 1, 1], [], []>} : vector<8x32xf32>, vector<32x8xf32>, vector<8x8xf32> -> vector<8x8xf32>
    %c0_15 = arith.constant 0 : index
    %c0_16 = arith.constant 0 : index
    %17 = vector.load %arg7[%c0_15, %c0_16] : memref<1x8xf32, #tpu.memory_space<vmem>>, vector<1x8xf32>
    %18 = vector.broadcast %17 : vector<1x8xf32> to vector<8x8xf32>
    %19 = arith.addf %16, %18 : vector<8x8xf32>
    %20 = vector.extract_strided_slice %19 {offsets = [0, 0], sizes = [8, 4], strides = [1, 1]} : vector<8x8xf32> to vector<8x4xf32>
    %21 = vector.extract_strided_slice %19 {offsets = [0, 4], sizes = [8, 4], strides = [1, 1]} : vector<8x8xf32> to vector<8x4xf32>
    %cst_17 = arith.constant -2.000000e+01 : f32
    %cst_18 = arith.constant 2.000000e+00 : f32
    %22 = vector.broadcast %cst_17 : f32 to vector<8x4xf32>
    %23 = arith.maximumf %22, %21 : vector<8x4xf32>
    %24 = vector.broadcast %cst_18 : f32 to vector<8x4xf32>
    %25 = arith.minimumf %24, %23 : vector<8x4xf32>
    %26 = math.exp %25 : vector<8x4xf32>
    %c0_19 = arith.constant 0 : index
    %c0_20 = arith.constant 0 : index
    %27 = vector.load %arg8[%c0_19, %c0_20] : memref<8x4xf32, #tpu.memory_space<vmem>>, vector<8x4xf32>
    %28 = arith.mulf %26, %27 : vector<8x4xf32>
    %29 = arith.addf %20, %28 : vector<8x4xf32>
    %30 = math.tanh %29 : vector<8x4xf32>
    %cst_21 = arith.constant -5.000000e-01 : f32
    %31 = vector.broadcast %cst_21 : f32 to vector<8x4xf32>
    %32 = arith.mulf %31, %27 : vector<8x4xf32>
    %33 = arith.mulf %32, %27 : vector<8x4xf32>
    %34 = arith.subf %33, %25 : vector<8x4xf32>
    %cst_22 = arith.constant 0.918938517 : f32
    %35 = vector.broadcast %cst_22 : f32 to vector<8x4xf32>
    %36 = arith.subf %34, %35 : vector<8x4xf32>
    %37 = arith.mulf %30, %30 : vector<8x4xf32>
    %cst_23 = arith.constant 1.000000e+00 : f32
    %38 = vector.broadcast %cst_23 : f32 to vector<8x4xf32>
    %39 = arith.subf %38, %37 : vector<8x4xf32>
    %cst_24 = arith.constant 9.99999997E-7 : f32
    %40 = vector.broadcast %cst_24 : f32 to vector<8x4xf32>
    %41 = arith.addf %39, %40 : vector<8x4xf32>
    %42 = math.log %41 : vector<8x4xf32>
    %43 = arith.subf %36, %42 : vector<8x4xf32>
    %cst_25 = arith.constant dense<0.000000e+00> : vector<8xf32>
    %44 = vector.multi_reduction <add>, %43, %cst_25 [1] : vector<8x4xf32> to vector<8xf32>
    %45 = vector.shape_cast %44 : vector<8xf32> to vector<8x1xf32>
    %cst_26 = arith.constant 0.000000e+00 : f32
    %46 = vector.broadcast %cst_26 : f32 to vector<8x123xf32>
    %47 = tpu.concatenate %30, %45, %46 in 1 : vector<8x4xf32>, vector<8x1xf32>, vector<8x123xf32> -> vector<8x128xf32>
    %c0_27 = arith.constant 0 : index
    %c0_28 = arith.constant 0 : index
    %48 = vector.load %arg9[%c0_27, %c0_28] : memref<8x128xf32, #tpu.memory_space<vmem>>, vector<8x128xf32>
    tpu.vector_store %arg9[%c0_27, %c0_28], %47 {strides = array<i32>} : memref<8x128xf32, #tpu.memory_space<vmem>>, vector<8x128xf32>,
    return
  }
  func.func @transform_0(%arg0: i32) -> (i32, i32) {
    %c0_i32 = arith.constant 0 : i32
    %c0_i32_0 = arith.constant 0 : i32
    return %arg0, %c0_i32 : i32, i32
  }
  func.func @transform_1(%arg0: i32) -> (i32, i32) {
    %c0_i32 = arith.constant 0 : i32
    %c0_i32_0 = arith.constant 0 : i32
    %c0_i32_1 = arith.constant 0 : i32
    return %c0_i32, %c0_i32_0 : i32, i32
  }
  func.func @transform_2(%arg0: i32) -> (i32, i32) {
    %c0_i32 = arith.constant 0 : i32
    %c0_i32_0 = arith.constant 0 : i32
    %c0_i32_1 = arith.constant 0 : i32
    return %c0_i32, %c0_i32_0 : i32, i32
  }
  func.func @transform_3(%arg0: i32) -> (i32, i32) {
    %c0_i32 = arith.constant 0 : i32
    %c0_i32_0 = arith.constant 0 : i32
    %c0_i32_1 = arith.constant 0 : i32
    return %c0_i32, %c0_i32_0 : i32, i32
  }
  func.func @transform_4(%arg0: i32) -> (i32, i32) {
    %c0_i32 = arith.constant 0 : i32
    %c0_i32_0 = arith.constant 0 : i32
    %c0_i32_1 = arith.constant 0 : i32
    return %c0_i32, %c0_i32_0 : i32, i32
  }
  func.func @transform_5(%arg0: i32) -> (i32, i32) {
    %c0_i32 = arith.constant 0 : i32
    %c0_i32_0 = arith.constant 0 : i32
    %c0_i32_1 = arith.constant 0 : i32
    return %c0_i32, %c0_i32_0 : i32, i32
  }
  func.func @transform_6(%arg0: i32) -> (i32, i32) {
    %c0_i32 = arith.constant 0 : i32
    %c0_i32_0 = arith.constant 0 : i32
    %c0_i32_1 = arith.constant 0 : i32
    return %c0_i32, %c0_i32_0 : i32, i32
  }
  func.func @transform_7(%arg0: i32) -> (i32, i32) {
    %c0_i32 = arith.constant 0 : i32
    %c0_i32_0 = arith.constant 0 : i32
    return %arg0, %c0_i32 : i32, i32
  }
  func.func @transform_8(%arg0: i32) -> (i32, i32) {
    %c0_i32 = arith.constant 0 : i32
    %c0_i32_0 = arith.constant 0 : i32
    return %arg0, %c0_i32 : i32, i32
  }
}

</mosaic_0001>

<llo_original>
// kernel: tpu_custom_call.1
$region0: #{tpu_custom_call.1}
  #allocation0 [shape = 'u32[]', space=smem, size = 0x4, offset = 0x4, fixed_abs, tag = 'smem constant byte address 0x4 - core index']
  #allocation1 [shape = 'u32[144,128]{1,0:T(1,128)}', space=vmem, size = 0x12000, scoped, tag = 'internal scratch']
  %s0 = inlined_call_operand.hbm [shape: f32[8,16], index: 0, kind: input, shape index: {}]
  %s1 = inlined_call_operand.vmem [shape: f32[16,32], index: 1, kind: input, shape index: {}]
  %s2 = inlined_call_operand.vmem [shape: f32[1,32], index: 2, kind: input, shape index: {}]
  %s3 = inlined_call_operand.vmem [shape: f32[32,32], index: 3, kind: input, shape index: {}]
  %s4 = inlined_call_operand.hbm [shape: f32[1,32], index: 4, kind: input, shape index: {}]
  %s5 = inlined_call_operand.vmem [shape: f32[32,8], index: 5, kind: input, shape index: {}]
  %s6 = inlined_call_operand.vmem [shape: f32[1,8], index: 6, kind: input, shape index: {}]
  %s7 = inlined_call_operand.vmem [shape: f32[8,4], index: 7, kind: input, shape index: {}]
  %s8 = inlined_call_operand.hbm [shape: f32[8,128], index: 8, kind: output, shape index: {}]
  %s9 = sld [smem:[#allocation0]]
  $region50: #{tpu_custom_call.1} parent=0
    _
  %s11 = ssub.s32 1, %s9
  %s12 = scalar_select 0, %s11, %s9
  $region1: #{tpu_custom_call.1} parent=0
    #allocation2 [shape = 'u8[4096]{0}', space=vmem, size = 0x1000, scoped, tag = 'input window, operand 0, single buffered']
    #allocation3 [shape = 's32[1]{0}', space=sflag, size = 0x4, scoped, tag = 'scoped memory for tpu_custom_call.1']
    #allocation4 [shape = 's32[1]{0}', space=sflag, size = 0x4, scoped, tag = 'scoped memory for tpu_custom_call.1']
    #allocation5 [shape = 'u8[512]{0}', space=vmem, size = 0x400, scoped, tag = 'input window, operand 4, single buffered']
    #allocation6 [shape = 's32[1]{0}', space=sflag, size = 0x4, scoped, tag = 'scoped memory for tpu_custom_call.1']
    #allocation7 [shape = 'u8[4096]{0}', space=vmem, size = 0x1000, scoped, tag = 'output window, operand 0, single buffered']
    %13 = vsyncpa [#allocation3], 0
    %14 = vsyncpa [#allocation6], 0
    %15 = vsyncpa [#allocation4], 0
    // Predicated region
    $region2: #{tpu_custom_call.1} parent=1 // pred_check
      _
    $region3: #{tpu_custom_call.1} parent=1 // pred_check_branch
      %17 = sbr.rel (0) target = $region5
    $region4: #{tpu_custom_call.1} parent=1 // pred_region
      %s19 = ssub.s32 128, 128
      %20 = vsyncadd [#allocation3], %s19
      %s22 = sshll.u32 [#allocation2], 4
      %s23 = int_to_ptr.vmem [resolvable:$true] %s22
      %25 = dma.hbm_to_vmem [thread:$0]  %s0, 128, %s23, [#allocation3]
    $region5: #{tpu_custom_call.1} parent=1 // pred_fallthru
      _
    // Predicated region
    $region6: #{tpu_custom_call.1} parent=1 // pred_check
      _
    $region7: #{tpu_custom_call.1} parent=1 // pred_check_branch
      %27 = sbr.rel (0) target = $region9
    $region8: #{tpu_custom_call.1} parent=1 // pred_region
      _
    $region9: #{tpu_custom_call.1} parent=1 // pred_fallthru
      _
    // Predicated region
    $region10: #{tpu_custom_call.1} parent=1 // pred_check
      _
    $region11: #{tpu_custom_call.1} parent=1 // pred_check_branch
      %29 = sbr.rel (0) target = $region13
    $region12: #{tpu_custom_call.1} parent=1 // pred_region
      _
    $region13: #{tpu_custom_call.1} parent=1 // pred_fallthru
      _
    // Predicated region
    $region14: #{tpu_custom_call.1} parent=1 // pred_check
      _
    $region15: #{tpu_custom_call.1} parent=1 // pred_check_branch
      %31 = sbr.rel (0) target = $region17
    $region16: #{tpu_custom_call.1} parent=1 // pred_region
      _
    $region17: #{tpu_custom_call.1} parent=1 // pred_fallthru
      _
    // Predicated region
    $region18: #{tpu_custom_call.1} parent=1 // pred_check
      _
    $region19: #{tpu_custom_call.1} parent=1 // pred_check_branch
      %33 = sbr.rel (0) target = $region21
    $region20: #{tpu_custom_call.1} parent=1 // pred_region
      %s35 = ssub.s32 16, 16
      %36 = vsyncadd [#allocation6], %s35
      %s38 = sshll.u32 [#allocation5], 4
      %s39 = int_to_ptr.vmem [resolvable:$true] %s38
      %41 = dma.hbm_to_vmem [thread:$0]  %s4, 16, %s39, [#allocation6]
    $region21: #{tpu_custom_call.1} parent=1 // pred_fallthru
      _
    // Predicated region
    $region22: #{tpu_custom_call.1} parent=1 // pred_check
      _
    $region23: #{tpu_custom_call.1} parent=1 // pred_check_branch
      %43 = sbr.rel (0) target = $region25
    $region24: #{tpu_custom_call.1} parent=1 // pred_region
      _
    $region25: #{tpu_custom_call.1} parent=1 // pred_fallthru
      _
    // Predicated region
    $region26: #{tpu_custom_call.1} parent=1 // pred_check
      _
    $region27: #{tpu_custom_call.1} parent=1 // pred_check_branch
      %45 = sbr.rel (0) target = $region29
    $region28: #{tpu_custom_call.1} parent=1 // pred_region
      _
    $region29: #{tpu_custom_call.1} parent=1 // pred_fallthru
      _
    // Predicated region
    $region30: #{tpu_custom_call.1} parent=1 // pred_check
      _
    $region31: #{tpu_custom_call.1} parent=1 // pred_check_branch
      %47 = sbr.rel (0) target = $region33
    $region32: #{tpu_custom_call.1} parent=1 // pred_region
      _
    $region33: #{tpu_custom_call.1} parent=1 // pred_fallthru
      _
    // Predicated region
    $region34: #{tpu_custom_call.1} parent=1 // pred_check
      _
    $region35: #{tpu_custom_call.1} parent=1 // pred_check_branch
      %49 = sbr.rel (0) target = $region37
    $region36: #{tpu_custom_call.1} parent=1 // pred_region
      %50 = dma.done [#allocation3], 128
    $region37: #{tpu_custom_call.1} parent=1 // pred_fallthru
      _
    // Predicated region
    $region38: #{tpu_custom_call.1} parent=1 // pred_check
      _
    $region39: #{tpu_custom_call.1} parent=1 // pred_check_branch
      %52 = sbr.rel (0) target = $region41
    $region40: #{tpu_custom_call.1} parent=1 // pred_region
      %53 = dma.done [#allocation6], 16
    $region41: #{tpu_custom_call.1} parent=1 // pred_fallthru
      _
    %v54 = vld [vmem:[#allocation2] sm:$0xff]
    %v55 = vld [vmem:[%s1] sm:$0xff]
    %v56 = vld [vmem:[%s1 + $0x8] sm:$0xff]
    %v57 = vld [vmem:[%s2] sm:$0x1]
    %v59 = vlaneseq
    %v60 = vshrl.u32 %v59, 7
    %v61 = vsub.s32 0, %v60
    %v62 = vrot.slane %v57, %v61
    %vm64 = vcmask 130048
    %v66 = vsel %vm64, %v54, 0
    %68 = vmatprep.subr.mxu0 0.0
    %69 = vmatpush1.msra.mxu0 0.0
    %70 = vmatprep.subr.mxu0 0.0
    %71 = vmatpush1.msra.mxu0 0.0
    %72 = vmatprep.subr.mxu0 0.0
    %73 = vmatpush1.msra.mxu0 0.0
    %74 = vmatprep.subr.mxu0 0.0
    %75 = vmatpush1.msra.mxu0 0.0
    %76 = vmatprep.subr.mxu0 0.0
    %77 = vmatpush1.msra.mxu0 0.0
    %78 = vmatprep.subr.mxu0 0.0
    %79 = vmatpush1.msra.mxu0 0.0
    %80 = vmatprep.subr.mxu0 0.0
    %81 = vmatpush1.msra.mxu0 0.0
    %82 = vmatprep.subr.mxu0 0.0
    %83 = vmatpush1.msra.mxu0 0.0
    %84 = vmatprep.subr.mxu0 0.0
    %85 = vmatpush1.msra.mxu0 0.0
    %86 = vmatprep.subr.mxu0 0.0
    %87 = vmatpush1.msra.mxu0 0.0
    %88 = vmatprep.subr.mxu0 0.0
    %89 = vmatpush1.msra.mxu0 0.0
    %90 = vmatprep.subr.mxu0 0.0
    %91 = vmatpush1.msra.mxu0 0.0
    %92 = vmatprep.subr.mxu0 0.0
    %93 = vmatpush1.msra.mxu0 0.0
    %94 = vmatprep.subr.mxu0 0.0
    %95 = vmatpush1.msra.mxu0 0.0
    %96 = vmatprep.subr.mxu0 0.0
    %97 = vmatpush1.msra.mxu0 %v56
    %98 = vmatprep.subr.mxu0 0.0
    %99 = vmatpush1.msra.mxu0 %v55
    %100 = vmatprep.subr.mxu0 0.0
    %101 = vmatpush2.msra.mxu0 0.0
    %102 = vmatprep.subr.mxu0 0.0
    %103 = vmatpush2.msra.mxu0 0.0
    %104 = vmatprep.subr.mxu0 0.0
    %105 = vmatpush2.msra.mxu0 0.0
    %106 = vmatprep.subr.mxu0 0.0
    %107 = vmatpush2.msra.mxu0 0.0
    %108 = vmatprep.subr.mxu0 0.0
    %109 = vmatpush2.msra.mxu0 0.0
    %110 = vmatprep.subr.mxu0 0.0
    %111 = vmatpush2.msra.mxu0 0.0
    %112 = vmatprep.subr.mxu0 0.0
    %113 = vmatpush2.msra.mxu0 0.0
    %114 = vmatprep.subr.mxu0 0.0
    %115 = vmatpush2.msra.mxu0 0.0
    %116 = vmatprep.subr.mxu0 0.0
    %117 = vmatpush2.msra.mxu0 0.0
    %118 = vmatprep.subr.mxu0 0.0
    %119 = vmatpush2.msra.mxu0 0.0
    %120 = vmatprep.subr.mxu0 0.0
    %121 = vmatpush2.msra.mxu0 0.0
    %122 = vmatprep.subr.mxu0 0.0
    %123 = vmatpush2.msra.mxu0 0.0
    %124 = vmatprep.subr.mxu0 0.0
    %125 = vmatpush2.msra.mxu0 0.0
    %126 = vmatprep.subr.mxu0 0.0
    %127 = vmatpush2.msra.mxu0 0.0
    %128 = vmatprep.subr.mxu0 0.0
    %129 = vmatpush2.msra.mxu0 0.0
    %130 = vmatprep.subr.mxu0 0.0
    %131 = vmatpush2.msra.mxu0 0.0
    %132 = vmatprep.mubr.f32.mxu0 0.0
    %133 = vmatmul.mubr.f32.gmra.mxu0 %v66
    %v134 = vpop.f32.mrf.mxu0
    %v135 = vadd.f32 %v62, %v134
    %v136 = vpop.f32.mrf.mxu0
    %137 = vdwg.mxu0
    %v138 = vmax.f32 %v135, 0.0
    %v139 = vld [vmem:[%s3] sm:$0xff]
    %v140 = vld [vmem:[%s3 + $0x8] sm:$0xff]
    %v141 = vld [vmem:[%s3 + $0x10] sm:$0xff]
    %v142 = vld [vmem:[%s3 + $0x18] sm:$0xff]
    %v143 = vld [vmem:[#allocation5] sm:$0x1]
    %v145 = vlaneseq
    %v146 = vshrl.u32 %v145, 7
    %v147 = vsub.s32 0, %v146
    %v148 = vrot.slane %v143, %v147
    %vm150 = vcmask 261120
    %v152 = vsel %vm150, %v138, 0
    %154 = vmatprep.subr.mxu0 0.0
    %155 = vmatpush1.msra.mxu0 0.0
    %156 = vmatprep.subr.mxu0 0.0
    %157 = vmatpush1.msra.mxu0 0.0
    %158 = vmatprep.subr.mxu0 0.0
    %159 = vmatpush1.msra.mxu0 0.0
    %160 = vmatprep.subr.mxu0 0.0
    %161 = vmatpush1.msra.mxu0 0.0
    %162 = vmatprep.subr.mxu0 0.0
    %163 = vmatpush1.msra.mxu0 0.0
    %164 = vmatprep.subr.mxu0 0.0
    %165 = vmatpush1.msra.mxu0 0.0
    %166 = vmatprep.subr.mxu0 0.0
    %167 = vmatpush1.msra.mxu0 0.0
    %168 = vmatprep.subr.mxu0 0.0
    %169 = vmatpush1.msra.mxu0 0.0
    %170 = vmatprep.subr.mxu0 0.0
    %171 = vmatpush1.msra.mxu0 0.0
    %172 = vmatprep.subr.mxu0 0.0
    %173 = vmatpush1.msra.mxu0 0.0
    %174 = vmatprep.subr.mxu0 0.0
    %175 = vmatpush1.msra.mxu0 0.0
    %176 = vmatprep.subr.mxu0 0.0
    %177 = vmatpush1.msra.mxu0 0.0
    %178 = vmatprep.subr.mxu0 0.0
    %179 = vmatpush1.msra.mxu0 %v142
    %180 = vmatprep.subr.mxu0 0.0
    %181 = vmatpush1.msra.mxu0 %v141
    %182 = vmatprep.subr.mxu0 0.0
    %183 = vmatpush1.msra.mxu0 %v140
    %184 = vmatprep.subr.mxu0 0.0
    %185 = vmatpush1.msra.mxu0 %v139
    %186 = vmatprep.subr.mxu0 0.0
    %187 = vmatpush2.msra.mxu0 0.0
    %188 = vmatprep.subr.mxu0 0.0
    %189 = vmatpush2.msra.mxu0 0.0
    %190 = vmatprep.subr.mxu0 0.0
    %191 = vmatpush2.msra.mxu0 0.0
    %192 = vmatprep.subr.mxu0 0.0
    %193 = vmatpush2.msra.mxu0 0.0
    %194 = vmatprep.subr.mxu0 0.0
    %195 = vmatpush2.msra.mxu0 0.0
    %196 = vmatprep.subr.mxu0 0.0
    %197 = vmatpush2.msra.mxu0 0.0
    %198 = vmatprep.subr.mxu0 0.0
    %199 = vmatpush2.msra.mxu0 0.0
    %200 = vmatprep.subr.mxu0 0.0
    %201 = vmatpush2.msra.mxu0 0.0
    %202 = vmatprep.subr.mxu0 0.0
    %203 = vmatpush2.msra.mxu0 0.0
    %204 = vmatprep.subr.mxu0 0.0
    %205 = vmatpush2.msra.mxu0 0.0
    %206 = vmatprep.subr.mxu0 0.0
    %207 = vmatpush2.msra.mxu0 0.0
    %208 = vmatprep.subr.mxu0 0.0
    %209 = vmatpush2.msra.mxu0 0.0
    %210 = vmatprep.subr.mxu0 0.0
    %211 = vmatpush2.msra.mxu0 0.0
    %212 = vmatprep.subr.mxu0 0.0
    %213 = vmatpush2.msra.mxu0 0.0
    %214 = vmatprep.subr.mxu0 0.0
    %215 = vmatpush2.msra.mxu0 0.0
    %216 = vmatprep.subr.mxu0 0.0
    %217 = vmatpush2.msra.mxu0 0.0
    %218 = vmatprep.mubr.f32.mxu0 0.0
    %219 = vmatmul.mubr.f32.gmra.mxu0 %v152
    %v220 = vpop.f32.mrf.mxu0
    %v221 = vadd.f32 %v148, %v220
    %v222 = vpop.f32.mrf.mxu0
    %223 = vdwg.mxu0
    %v224 = vmax.f32 %v221, 0.0
    %v225 = vld [vmem:[%s5] sm:$0xff]
    %v226 = vld [vmem:[%s5 + $0x8] sm:$0xff]
    %v227 = vld [vmem:[%s5 + $0x10] sm:$0xff]
    %v228 = vld [vmem:[%s5 + $0x18] sm:$0xff]
    %v229 = vld [vmem:[%s6] sm:$0x1]
    %v231 = vlaneseq
    %v232 = vshrl.u32 %v231, 7
    %v233 = vsub.s32 0, %v232
    %v234 = vrot.slane %v229, %v233
    %v237 = vsel %vm150, %v224, 0
    %239 = vmatprep.subr.mxu0 0.0
    %240 = vmatpush1.msra.mxu0 0.0
    %241 = vmatprep.subr.mxu0 0.0
    %242 = vmatpush1.msra.mxu0 0.0
    %243 = vmatprep.subr.mxu0 0.0
    %244 = vmatpush1.msra.mxu0 0.0
    %245 = vmatprep.subr.mxu0 0.0
    %246 = vmatpush1.msra.mxu0 0.0
    %247 = vmatprep.subr.mxu0 0.0
    %248 = vmatpush1.msra.mxu0 0.0
    %249 = vmatprep.subr.mxu0 0.0
    %250 = vmatpush1.msra.mxu0 0.0
    %251 = vmatprep.subr.mxu0 0.0
    %252 = vmatpush1.msra.mxu0 0.0
    %253 = vmatprep.subr.mxu0 0.0
    %254 = vmatpush1.msra.mxu0 0.0
    %255 = vmatprep.subr.mxu0 0.0
    %256 = vmatpush1.msra.mxu0 0.0
    %257 = vmatprep.subr.mxu0 0.0
    %258 = vmatpush1.msra.mxu0 0.0
    %259 = vmatprep.subr.mxu0 0.0
    %260 = vmatpush1.msra.mxu0 0.0
    %261 = vmatprep.subr.mxu0 0.0
    %262 = vmatpush1.msra.mxu0 0.0
    %263 = vmatprep.subr.mxu0 0.0
    %264 = vmatpush1.msra.mxu0 %v228
    %265 = vmatprep.subr.mxu0 0.0
    %266 = vmatpush1.msra.mxu0 %v227
    %267 = vmatprep.subr.mxu0 0.0
    %268 = vmatpush1.msra.mxu0 %v226
    %269 = vmatprep.subr.mxu0 0.0
    %270 = vmatpush1.msra.mxu0 %v225
    %271 = vmatprep.subr.mxu0 0.0
    %272 = vmatpush2.msra.mxu0 0.0
    %273 = vmatprep.subr.mxu0 0.0
    %274 = vmatpush2.msra.mxu0 0.0
    %275 = vmatprep.subr.mxu0 0.0
    %276 = vmatpush2.msra.mxu0 0.0
    %277 = vmatprep.subr.mxu0 0.0
    %278 = vmatpush2.msra.mxu0 0.0
    %279 = vmatprep.subr.mxu0 0.0
    %280 = vmatpush2.msra.mxu0 0.0
    %281 = vmatprep.subr.mxu0 0.0
    %282 = vmatpush2.msra.mxu0 0.0
    %283 = vmatprep.subr.mxu0 0.0
    %284 = vmatpush2.msra.mxu0 0.0
    %285 = vmatprep.subr.mxu0 0.0
    %286 = vmatpush2.msra.mxu0 0.0
    %287 = vmatprep.subr.mxu0 0.0
    %288 = vmatpush2.msra.mxu0 0.0
    %289 = vmatprep.subr.mxu0 0.0
    %290 = vmatpush2.msra.mxu0 0.0
    %291 = vmatprep.subr.mxu0 0.0
    %292 = vmatpush2.msra.mxu0 0.0
    %293 = vmatprep.subr.mxu0 0.0
    %294 = vmatpush2.msra.mxu0 0.0
    %295 = vmatprep.subr.mxu0 0.0
    %296 = vmatpush2.msra.mxu0 0.0
    %297 = vmatprep.subr.mxu0 0.0
    %298 = vmatpush2.msra.mxu0 0.0
    %299 = vmatprep.subr.mxu0 0.0
    %300 = vmatpush2.msra.mxu0 0.0
    %301 = vmatprep.subr.mxu0 0.0
    %302 = vmatpush2.msra.mxu0 0.0
    %303 = vmatprep.mubr.f32.mxu0 0.0
    %304 = vmatmul.mubr.f32.gmra.mxu0 %v237
    %v305 = vpop.f32.mrf.mxu0
    %v306 = vadd.f32 %v234, %v305
    %v307 = vpop.f32.mrf.mxu0
    %308 = vdwg.mxu0
    %v309 = vmax.f32 %v306, -20.0
    %v310 = vmin.f32 %v309, 2.0
    %v311 = vmul.f32 %v310, 1.442695
    %v312 = vpow.pop %v311
    %v313 = vld [vmem:[%s7] sm:$0xff]
    %315 = vrot.lane.b32.xlu0 %v313, 4
    %v316 = vpop.permute.xlu0 %315
    %v318 = vmul.f32 %v312, %v316
    %320 = vrot.lane.b32.xlu0 %v318, 124
    %v321 = vpop.permute.xlu0 %320
    %v323 = vadd.f32 %v306, %v321
    %v324 = vtanh.pop %v323
    %v325 = vmul.f32 %v313, -0.5
    %v326 = vmul.f32 %v325, %v313
    %328 = vrot.lane.b32.xlu0 %v310, 124
    %v329 = vpop.permute.xlu0 %328
    %v331 = vsub.f32 %v326, %v329
    %v332 = vsub.f32 %v331, 0.9189385
    %v333 = vmul.f32 %v324, %v324
    %v334 = vsub.f32 1.0, %v333
    %v335 = vadd.f32 %v334, 1e-06
    %v336 = vlog2.pop %v335
    %v337 = vmul.f32 %v336, 0.6931472
    %v338 = vsub.f32 %v332, %v337
    %vm339 = vcmask 31744
    %v340 = vsel %vm339, %v338, 0.0
    %341 = vadd.xlane.f32.xlu0 %v340
    %v342 = vpop.xlane.xlu0 %341
    %v343 = vsel %vm339, %v324, %v342
    %vm344 = vcmask 39936
    %v345 = vsel %vm344, %v343, 0.0
    %346 = vst [vmem:[#allocation7] sm:$0xff] %v345
    // Predicated region
    $region42: #{tpu_custom_call.1} parent=1 // pred_check
      _
    $region43: #{tpu_custom_call.1} parent=1 // pred_check_branch
      %348 = sbr.rel (0) target = $region45
    $region44: #{tpu_custom_call.1} parent=1 // pred_region
      %s350 = ssub.s32 128, 128
      %351 = vsyncadd [#allocation4], %s350
      %s353 = sshll.u32 [#allocation7], 4
      %s354 = int_to_ptr.vmem [resolvable:$true] %s353
      %356 = dma.vmem_to_hbm [thread:$0]  %s354, 128, %s8, [#allocation4]
    $region45: #{tpu_custom_call.1} parent=1 // pred_fallthru
      _
    // Predicated region
    $region46: #{tpu_custom_call.1} parent=1 // pred_check
      _
    $region47: #{tpu_custom_call.1} parent=1 // pred_check_branch
      %358 = sbr.rel (0) target = $region49
    $region48: #{tpu_custom_call.1} parent=1 // pred_region
      %359 = dma.done [#allocation4], 128
    $region49: #{tpu_custom_call.1} parent=1 // pred_fallthru
      _
    %360 = vsyncpa [#allocation3], 1
    %361 = vsyncpa [#allocation6], 1
    %362 = vsyncpa [#allocation4], 1

</llo_original>
